<compile_context>
chip_gen: v6e
topology: v6e:2x2x1
jax: 0.10.0
libtpu: 0.0.40
codegen_flags: <defaults>
</compile_context>

<pallas_src>
import functools
import math

import jax
import jax.numpy as jnp
from jax.experimental import pallas as pl
from jax.experimental.pallas import tpu as pltpu

_MASK_VALUE = -1e30   # finite "-inf": masked f32 probs underflow to exactly 0 (no inf-inf NaN)


@functools.lru_cache(maxsize=None)
def _vmem_limit_bytes():
    """Per-generation VMEM cap: ~3/4 of physical, <=100 MiB (v5e/v6e), 48 MiB on v7x."""
    try:
        cap = int(pltpu.get_tpu_info().vmem_capacity_bytes)
    except Exception:  # older jax or no hw info: conservative default that fits v7x
        return 48 * 1024 * 1024
    return int(min(cap * 3 // 4, 100 * 1024 * 1024))


def _pick_tile(dim, cap):
    """Largest tile <= cap that evenly divides `dim` (falls back to the full dim).

    Keeps every grid an exact divisor: no pad/concat or output slicing in wrappers.
    """
    if dim <= cap:
        return dim
    for t in sorted({cap, 2048, 1536, 1024, 768, 512, 384, 256, 128, 64, 32, 16, 8},
                    reverse=True):
        if t <= cap and dim % t == 0:
            return t
    return dim  # full-dim block is always legal


# ---------------------------------------------------------------- GEMM (+bias)

def _matmul_bias_kernel_noacc(x_ref, w_ref, b_ref, o_ref):
    acc = jnp.dot(x_ref[...], w_ref[...], preferred_element_type=jnp.float32)
    o_ref[...] = (acc + b_ref[...].astype(jnp.float32)).astype(o_ref.dtype)


def _matmul_kernel_noacc(x_ref, w_ref, o_ref):
    o_ref[...] = jnp.dot(x_ref[...], w_ref[...],
                         preferred_element_type=jnp.float32).astype(o_ref.dtype)


def _matmul_bias_kernel_acc(x_ref, w_ref, b_ref, o_ref, acc_ref):
    @pl.when(pl.program_id(2) == 0)
    def _():
        acc_ref[...] = jnp.zeros_like(acc_ref)

    acc_ref[...] += jnp.dot(x_ref[...], w_ref[...],
                            preferred_element_type=jnp.float32)

    @pl.when(pl.program_id(2) == pl.num_programs(2) - 1)
    def _():
        o_ref[...] = (acc_ref[...] + b_ref[...].astype(jnp.float32)).astype(o_ref.dtype)


def _matmul_kernel_acc(x_ref, w_ref, o_ref, acc_ref):
    @pl.when(pl.program_id(2) == 0)
    def _():
        acc_ref[...] = jnp.zeros_like(acc_ref)

    acc_ref[...] += jnp.dot(x_ref[...], w_ref[...],
                            preferred_element_type=jnp.float32)

    @pl.when(pl.program_id(2) == pl.num_programs(2) - 1)
    def _():
        o_ref[...] = acc_ref[...].astype(o_ref.dtype)


def linear(x2, w, b=None, *, tm_cap=512, tn_cap=512, tk_cap=2048):
    """x2:(M,K) @ w:(K,N) [+ b:(N,)] -> (M,N). Tiled MXU matmul."""
    M, K = x2.shape
    K2, N = w.shape
    assert K == K2, (x2.shape, w.shape)
    tm = _pick_tile(M, tm_cap)
    tn = _pick_tile(N, tn_cap)
    tk = _pick_tile(K, tk_cap)
    vmem = _vmem_limit_bytes()

    if tk == K:
        # Whole contraction fits in one block: no reduction axis, no accumulator.
        grid = (M // tm, N // tn)
        in_specs = [pl.BlockSpec((tm, K), lambda i, j: (i, 0)),
                    pl.BlockSpec((K, tn), lambda i, j: (0, j))]
        args = [x2, w]
        if b is not None:
            in_specs.append(pl.BlockSpec((1, tn), lambda i, j: (0, j)))
            args.append(b.reshape(1, N))
            kernel = _matmul_bias_kernel_noacc
        else:  # bias=False path: no extra bias DMA / VPU add
            kernel = _matmul_kernel_noacc
        return pl.pallas_call(
            kernel,
            out_shape=jax.ShapeDtypeStruct((M, N), x2.dtype),
            grid_spec=pltpu.PrefetchScalarGridSpec(
                num_scalar_prefetch=0,
                grid=grid,
                in_specs=in_specs,
                out_specs=pl.BlockSpec((tm, tn), lambda i, j: (i, j)),
            ),
            compiler_params=pltpu.CompilerParams(
                dimension_semantics=("parallel", "parallel"),
                vmem_limit_bytes=vmem,
            ),
        )(*args)

    # Large K: accumulate over the (last) reduction axis in f32 scratch.
    grid = (M // tm, N // tn, K // tk)
    in_specs = [pl.BlockSpec((tm, tk), lambda i, j, k: (i, k)),
                pl.BlockSpec((tk, tn), lambda i, j, k: (k, j))]
    args = [x2, w]
    if b is not None:
        in_specs.append(pl.BlockSpec((1, tn), lambda i, j, k: (0, j)))
        args.append(b.reshape(1, N))
        kernel = _matmul_bias_kernel_acc
    else:
        kernel = _matmul_kernel_acc

    return pl.pallas_call(
        kernel,
        out_shape=jax.ShapeDtypeStruct((M, N), x2.dtype),
        grid_spec=pltpu.PrefetchScalarGridSpec(
            num_scalar_prefetch=0,
            grid=grid,
            in_specs=in_specs,
            out_specs=pl.BlockSpec((tm, tn), lambda i, j, k: (i, j)),
            scratch_shapes=[pltpu.VMEM((tm, tn), jnp.float32)],
        ),
        compiler_params=pltpu.CompilerParams(
            dimension_semantics=("parallel", "parallel", "arbitrary"),
            vmem_limit_bytes=vmem,
        ),
    )(*args)


# --------------------------------------------------- causal flash attention

def _causal_attn_kernel(q_ref, k_ref, v_ref, o_ref, m_sc, l_sc, acc_sc,
                        *, scale, tq, tk):
    qi = pl.program_id(1)
    ki = pl.program_id(2)

    @pl.when(ki == 0)
    def _():
        m_sc[...] = jnp.full_like(m_sc, -jnp.inf)
        l_sc[...] = jnp.zeros_like(l_sc)
        acc_sc[...] = jnp.zeros_like(acc_sc)

    # Blocks entirely above the causal diagonal contribute nothing: skip them.
    # (tq == tk, so block (qi, ki) is above the diagonal iff ki > qi.)
    @pl.when(ki <= qi)
    def _():
        # Native-dtype MXU inputs (bf16 stays bf16); f32 accumulation via
        # preferred_element_type.  The 1/sqrt(hd) scale is folded into q.
        q = q_ref[0] * scale                                   # (tq, hd)
        k = k_ref[0]                                           # (tk, hd)
        s = jax.lax.dot_general(q, k, (((1,), (1,)), ((), ())),
                                preferred_element_type=jnp.float32)  # (tq, tk) f32

        def update(scores):
            m_prev = m_sc[...]
            m_new = jnp.maximum(m_prev, scores.max(axis=-1, keepdims=True))
            alpha = jnp.exp(m_prev - m_new)
            p = jnp.exp(scores - m_new)
            l_sc[...] = alpha * l_sc[...] + p.sum(axis=-1, keepdims=True)
            acc_sc[...] = alpha * acc_sc[...] + jnp.dot(
                p.astype(v_ref.dtype), v_ref[0],
                preferred_element_type=jnp.float32)
            m_sc[...] = m_new

        # Fully-below-diagonal blocks: no iota / compare / select work.
        @pl.when(ki < qi)
        def _():
            update(s)

        # Diagonal block: apply the causal mask (f32 scores; never in bf16).
        @pl.when(ki == qi)
        def _():
            row = qi * tq + jax.lax.broadcasted_iota(jnp.int32, (tq, tk), 0)
            col = ki * tk + jax.lax.broadcasted_iota(jnp.int32, (tq, tk), 1)
            update(jnp.where(col <= row, s, _MASK_VALUE))

    @pl.when(ki == pl.num_programs(2) - 1)
    def _():
        inv_l = pl.reciprocal(l_sc[...], approx=True)          # EUP slot
        o_ref[0] = (acc_sc[...] * inv_l).astype(o_ref.dtype)


def causal_flash_attention(q, k, v, *, tile_cap=512):
    """q,k,v: (B*H, T, hd) -> (B*H, T, hd). Causal mask, online softmax."""
    BH, T, hd = q.shape
    tq = _pick_tile(T, tile_cap)
    tk = tq
    # Equal aligned q/kv tiles guarantee every processed block has at least one
    # unmasked column per row (no -inf/-inf NaN path in the online softmax).
    assert tq == tk and T % tq == 0
    scale = 1.0 / math.sqrt(hd)
    grid = (BH, T // tq, T // tk)
    kernel = functools.partial(_causal_attn_kernel, scale=scale, tq=tq, tk=tk)

    # Skipped upper-triangular kv blocks reuse the resident block (no new DMA):
    kv_index_map = lambda b, qi, ki: (b, jnp.minimum(ki, qi), 0)

    return pl.pallas_call(
        kernel,
        out_shape=jax.ShapeDtypeStruct((BH, T, hd), q.dtype),
        grid_spec=pltpu.PrefetchScalarGridSpec(
            num_scalar_prefetch=0,
            grid=grid,
            in_specs=[pl.BlockSpec((1, tq, hd), lambda b, qi, ki: (b, qi, 0)),
                      pl.BlockSpec((1, tk, hd), kv_index_map),
                      pl.BlockSpec((1, tk, hd), kv_index_map)],
            out_specs=pl.BlockSpec((1, tq, hd), lambda b, qi, ki: (b, qi, 0)),
            scratch_shapes=[pltpu.VMEM((tq, 1), jnp.float32),
                            pltpu.VMEM((tq, 1), jnp.float32),
                            pltpu.VMEM((tq, hd), jnp.float32)],
        ),
        compiler_params=pltpu.CompilerParams(
            dimension_semantics=("parallel", "parallel", "arbitrary"),
            vmem_limit_bytes=_vmem_limit_bytes(),
        ),
    )(q, k, v)


# ------------------------------------------------------------- full module

def causal_self_attention(x, c_attn_w, c_attn_b, c_proj_w, c_proj_b, *, n_head):
    """Forward pass of CausalSelfAttention (eval mode: dropout = identity).

    Weights are (in_features, out_features), i.e. transpose of PyTorch .weight.
    `c_attn_b` may be None (config.bias=False path).
    """
    B, T, C = x.shape
    assert C % n_head == 0
    hd = C // n_head

    x2 = x.reshape(B * T, C)
    qkv = linear(x2, c_attn_w, c_attn_b)          # (B*T, 3C) -- QKV projection

    # TODO(synk): the head split/merge below is done with XLA reshape/transpose
    # (extra HBM round trips and a sub-128-lane attention out block).  Fusing
    # it into the attention BlockSpecs needs head-dim column blocks that are
    # 128-lane aligned, which generic hd (e.g. 64, or 8 in this demo) violates.
    def heads(z):
        return (z.reshape(B, T, n_head, hd)
                 .transpose(0, 2, 1, 3)
                 .reshape(B * n_head, T, hd))

    q = heads(qkv[:, :C])
    k = heads(qkv[:, C:2 * C])
    v = heads(qkv[:, 2 * C:])

    y = causal_flash_attention(q, k, v)           # (B*H, T, hd)
    y = (y.reshape(B, n_head, T, hd)
          .transpose(0, 2, 1, 3)
          .reshape(B * T, C))

    # TODO(synk): attn_dropout / resid_dropout are identity in eval mode; no
    # in-kernel dropout RNG is implemented here.
    out = linear(y, c_proj_w, c_proj_b)           # (B*T, C) -- output projection
    return out.reshape(B, T, C)


# ------------------------------------------------------------------ reference

def _reference(x, wqkv, bqkv, wproj, bproj, n_head):
    B, T, C = x.shape
    hd = C // n_head
    qkv = x @ wqkv + (0.0 if bqkv is None else bqkv)
    q, k, v = jnp.split(qkv, 3, axis=-1)
    q = q.reshape(B, T, n_head, hd).transpose(0, 2, 1, 3)
    k = k.reshape(B, T, n_head, hd).transpose(0, 2, 1, 3)
    v = v.reshape(B, T, n_head, hd).transpose(0, 2, 1, 3)
    att = (q @ jnp.swapaxes(k, -1, -2)) * (1.0 / math.sqrt(hd))
    mask = jnp.tril(jnp.ones((T, T), dtype=bool))
    att = jnp.where(mask, att, -jnp.inf)
    att = jax.nn.softmax(att, axis=-1)
    y = (att @ v).transpose(0, 2, 1, 3).reshape(B, T, C)
    return y @ wproj + bproj


if __name__ == "__main__":
    key = jax.random.PRNGKey(0)
    B, T, C, H = 2, 8, 32, 4
    kx, kw1, kb1, kw2, kb2 = jax.random.split(key, 5)

    x = jax.random.normal(kx, (B, T, C), dtype=jnp.float32)
    c_attn_w = jax.random.normal(kw1, (C, 3 * C), dtype=jnp.float32) * 0.02
    c_attn_b = jax.random.normal(kb1, (3 * C,), dtype=jnp.float32) * 0.02
    c_proj_w = jax.random.normal(kw2, (C, C), dtype=jnp.float32) * 0.02
    c_proj_b = jax.random.normal(kb2, (C,), dtype=jnp.float32) * 0.02

    y = jax.block_until_ready(
        causal_self_attention(x, c_attn_w, c_attn_b, c_proj_w, c_proj_b, n_head=H))

    ref = _reference(x, c_attn_w, c_attn_b, c_proj_w, c_proj_b, H)
    err = float(jnp.max(jnp.abs(y - ref)))
    assert err < 5e-3, f"max abs err {err}"

    # Also exercise the bias=False (config.bias=False) QKV path.
    y_nb = jax.block_until_ready(
        causal_self_attention(x, c_attn_w, None, c_proj_w, c_proj_b, n_head=H))
    ref_nb = _reference(x, c_attn_w, None, c_proj_w, c_proj_b, H)
    err_nb = float(jnp.max(jnp.abs(y_nb - ref_nb)))
    assert err_nb < 5e-3, f"max abs err (no bias) {err_nb}"

    print("KERNEL_OK")
</pallas_src>

<mosaic_0001>
module attributes {stable_mosaic.version = 11 : i64} {
  func.func @_matmul_bias_kernel_noacc(%arg0: i32, %arg1: i32, %arg2: memref<16x32xf32, #tpu.memory_space<vmem>>, %arg3: memref<32x96xf32, #tpu.memory_space<vmem>>, %arg4: memref<1x96xf32, #tpu.memory_space<vmem>>, %arg5: memref<16x96xf32, #tpu.memory_space<vmem>>) attributes {dimension_semantics = [#tpu.dimension_semantics<parallel>, #tpu.dimension_semantics<parallel>], iteration_bounds = array<i64: 1, 1>, scalar_prefetch = 0 : i64, scratch_operands = 0 : i64, tpu.core_type = #tpu.core_type<tc>, window_params = [{transform_indices = @transform_0, window_bounds = array<i64: 16, 32>}, {transform_indices = @transform_1, window_bounds = array<i64: 32, 96>}, {transform_indices = @transform_2, window_bounds = array<i64: 1, 96>}, {transform_indices = @transform_3, window_bounds = array<i64: 16, 96>}]} {
    %c0 = arith.constant 0 : index
    %c0_0 = arith.constant 0 : index
    %0 = vector.load %arg2[%c0, %c0_0] : memref<16x32xf32, #tpu.memory_space<vmem>>, vector<16x32xf32>
    %c0_1 = arith.constant 0 : index
    %c0_2 = arith.constant 0 : index
    %1 = vector.load %arg3[%c0_1, %c0_2] : memref<32x96xf32, #tpu.memory_space<vmem>>, vector<32x96xf32>
    %cst = arith.constant dense<0.000000e+00> : vector<16x96xf32>
    %2 = tpu.matmul %0, %1, %cst {dimension_numbers = #tpu.dot_dimension_numbers<[1], [0], [0], [1], [0, 0, 1, 1], [], []>} : vector<16x32xf32>, vector<32x96xf32>, vector<16x96xf32> -> vector<16x96xf32>
    %c0_3 = arith.constant 0 : index
    %c0_4 = arith.constant 0 : index
    %3 = vector.load %arg4[%c0_3, %c0_4] : memref<1x96xf32, #tpu.memory_space<vmem>>, vector<1x96xf32>
    %4 = vector.broadcast %3 : vector<1x96xf32> to vector<16x96xf32>
    %5 = arith.addf %2, %4 : vector<16x96xf32>
    %c0_5 = arith.constant 0 : index
    %c0_6 = arith.constant 0 : index
    %6 = vector.load %arg5[%c0_5, %c0_6] : memref<16x96xf32, #tpu.memory_space<vmem>>, vector<16x96xf32>
    tpu.vector_store %arg5[%c0_5, %c0_6], %5 {strides = array<i32>} : memref<16x96xf32, #tpu.memory_space<vmem>>, vector<16x96xf32>,
    return
  }
  func.func @transform_0(%arg0: i32, %arg1: i32) -> (i32, i32) {
    %c0_i32 = arith.constant 0 : i32
    %c0_i32_0 = arith.constant 0 : i32
    return %arg0, %c0_i32 : i32, i32
  }
  func.func @transform_1(%arg0: i32, %arg1: i32) -> (i32, i32) {
    %c0_i32 = arith.constant 0 : i32
    %c0_i32_0 = arith.constant 0 : i32
    return %c0_i32, %arg1 : i32, i32
  }
  func.func @transform_2(%arg0: i32, %arg1: i32) -> (i32, i32) {
    %c0_i32 = arith.constant 0 : i32
    %c0_i32_0 = arith.constant 0 : i32
    return %c0_i32, %arg1 : i32, i32
  }
  func.func @transform_3(%arg0: i32, %arg1: i32) -> (i32, i32) {
    %c0_i32 = arith.constant 0 : i32
    return %arg0, %arg1 : i32, i32
  }
}

</mosaic_0001>

<llo_original>
// kernel: tpu_custom_call.1
$region0: #{tpu_custom_call.1}
  #allocation0 [shape = 'u32[]', space=smem, size = 0x4, offset = 0x4, fixed_abs, tag = 'smem constant byte address 0x4 - core index']
  #allocation1 [shape = 'u32[144,128]{1,0:T(1,128)}', space=vmem, size = 0x12000, scoped, tag = 'internal scratch']
  %s0 = inlined_call_operand.hbm [shape: f32[16,32], index: 0, kind: input, shape index: {}]
  %s1 = inlined_call_operand.hbm [shape: f32[32,96], index: 1, kind: input, shape index: {}]
  %s2 = inlined_call_operand.vmem [shape: f32[1,96], index: 2, kind: input, shape index: {}]
  %s3 = inlined_call_operand.hbm [shape: f32[16,96], index: 3, kind: output, shape index: {}]
  %s4 = sld [smem:[#allocation0]]
  $region30: #{tpu_custom_call.1} parent=0
    _
  %s6 = ssub.s32 1, %s4
  %s7 = scalar_select 0, %s6, %s4
  $region1: #{tpu_custom_call.1} parent=0
    #allocation2 [shape = 'u8[8192]{0}', space=vmem, size = 0x2000, scoped, tag = 'input window, operand 0, single buffered']
    #allocation3 [shape = 's32[1]{0}', space=sflag, size = 0x4, scoped, tag = 'scoped memory for tpu_custom_call.1']
    #allocation4 [shape = 's32[1]{0}', space=sflag, size = 0x4, scoped, tag = 'scoped memory for tpu_custom_call.1']
    #allocation5 [shape = 'u8[16384]{0}', space=vmem, size = 0x4000, scoped, tag = 'input window, operand 1, single buffered']
    #allocation6 [shape = 's32[1]{0}', space=sflag, size = 0x4, scoped, tag = 'scoped memory for tpu_custom_call.1']
    #allocation7 [shape = 'u8[8192]{0}', space=vmem, size = 0x2000, scoped, tag = 'output window, operand 0, single buffered']
    %8 = vsyncpa [#allocation3], 0
    %9 = vsyncpa [#allocation6], 0
    %10 = vsyncpa [#allocation4], 0
    // Predicated region
    $region2: #{tpu_custom_call.1} parent=1 // pred_check
      _
    $region3: #{tpu_custom_call.1} parent=1 // pred_check_branch
      %12 = sbr.rel (0) target = $region5
    $region4: #{tpu_custom_call.1} parent=1 // pred_region
      %s14 = ssub.s32 256, 256
      %15 = vsyncadd [#allocation3], %s14
      %s16 = sshll.u32 [#allocation2], 4
      %s17 = int_to_ptr.vmem [resolvable:$true] %s16
      %22 = dma.hbm_to_vmem [thread:$0]  %s0, 256, %s17, [#allocation3], 128, 128, 8
    $region5: #{tpu_custom_call.1} parent=1 // pred_fallthru
      _
    // Predicated region
    $region6: #{tpu_custom_call.1} parent=1 // pred_check
      _
    $region7: #{tpu_custom_call.1} parent=1 // pred_check_branch
      %24 = sbr.rel (0) target = $region9
    $region8: #{tpu_custom_call.1} parent=1 // pred_region
      %s26 = ssub.s32 512, 512
      %27 = vsyncadd [#allocation6], %s26
      %s28 = sshll.u32 [#allocation5], 4
      %s29 = int_to_ptr.vmem [resolvable:$true] %s28
      %34 = dma.hbm_to_vmem [thread:$0]  %s1, 512, %s29, [#allocation6], 128, 128, 8
    $region9: #{tpu_custom_call.1} parent=1 // pred_fallthru
      _
    // Predicated region
    $region10: #{tpu_custom_call.1} parent=1 // pred_check
      _
    $region11: #{tpu_custom_call.1} parent=1 // pred_check_branch
      %36 = sbr.rel (0) target = $region13
    $region12: #{tpu_custom_call.1} parent=1 // pred_region
      _
    $region13: #{tpu_custom_call.1} parent=1 // pred_fallthru
      _
    // Predicated region
    $region14: #{tpu_custom_call.1} parent=1 // pred_check
      _
    $region15: #{tpu_custom_call.1} parent=1 // pred_check_branch
      %38 = sbr.rel (0) target = $region17
    $region16: #{tpu_custom_call.1} parent=1 // pred_region
      %39 = dma.done [#allocation3], 256
    $region17: #{tpu_custom_call.1} parent=1 // pred_fallthru
      _
    // Predicated region
    $region18: #{tpu_custom_call.1} parent=1 // pred_check
      _
    $region19: #{tpu_custom_call.1} parent=1 // pred_check_branch
      %41 = sbr.rel (0) target = $region21
    $region20: #{tpu_custom_call.1} parent=1 // pred_region
      %42 = dma.done [#allocation6], 512
    $region21: #{tpu_custom_call.1} parent=1 // pred_fallthru
      _
    %v43 = vld [vmem:[#allocation2] sm:$0xff]
    %v44 = vld [vmem:[#allocation2 + $0x8] sm:$0xff]
    %v45 = vld [vmem:[#allocation5] sm:$0xff]
    %v46 = vld [vmem:[#allocation5 + $0x8] sm:$0xff]
    %v47 = vld [vmem:[#allocation5 + $0x10] sm:$0xff]
    %v48 = vld [vmem:[#allocation5 + $0x18] sm:$0xff]
    %v49 = vld [vmem:[%s2] sm:$0x1]
    %v51 = vlaneseq
    %v52 = vshrl.u32 %v51, 7
    %v53 = vsub.s32 0, %v52
    %v54 = vrot.slane %v49, %v53
    %vm56 = vcmask 261120
    %v58 = vsel %vm56, %v43, 0
    %v61 = vsel %vm56, %v44, 0
    %63 = vmatprep.subr.mxu0 0.0
    %64 = vmatpush1.msra.mxu0 0.0
    %65 = vmatprep.subr.mxu0 0.0
    %66 = vmatpush1.msra.mxu0 0.0
    %67 = vmatprep.subr.mxu0 0.0
    %68 = vmatpush1.msra.mxu0 0.0
    %69 = vmatprep.subr.mxu0 0.0
    %70 = vmatpush1.msra.mxu0 0.0
    %71 = vmatprep.subr.mxu0 0.0
    %72 = vmatpush1.msra.mxu0 0.0
    %73 = vmatprep.subr.mxu0 0.0
    %74 = vmatpush1.msra.mxu0 0.0
    %75 = vmatprep.subr.mxu0 0.0
    %76 = vmatpush1.msra.mxu0 0.0
    %77 = vmatprep.subr.mxu0 0.0
    %78 = vmatpush1.msra.mxu0 0.0
    %79 = vmatprep.subr.mxu0 0.0
    %80 = vmatpush1.msra.mxu0 0.0
    %81 = vmatprep.subr.mxu0 0.0
    %82 = vmatpush1.msra.mxu0 0.0
    %83 = vmatprep.subr.mxu0 0.0
    %84 = vmatpush1.msra.mxu0 0.0
    %85 = vmatprep.subr.mxu0 0.0
    %86 = vmatpush1.msra.mxu0 0.0
    %87 = vmatprep.subr.mxu0 0.0
    %88 = vmatpush1.msra.mxu0 %v48
    %89 = vmatprep.subr.mxu0 0.0
    %90 = vmatpush1.msra.mxu0 %v47
    %91 = vmatprep.subr.mxu0 0.0
    %92 = vmatpush1.msra.mxu0 %v46
    %93 = vmatprep.subr.mxu0 0.0
    %94 = vmatpush1.msra.mxu0 %v45
    %95 = vmatprep.subr.mxu0 0.0
    %96 = vmatpush2.msra.mxu0 0.0
    %97 = vmatprep.subr.mxu0 0.0
    %98 = vmatpush2.msra.mxu0 0.0
    %99 = vmatprep.subr.mxu0 0.0
    %100 = vmatpush2.msra.mxu0 0.0
    %101 = vmatprep.subr.mxu0 0.0
    %102 = vmatpush2.msra.mxu0 0.0
    %103 = vmatprep.subr.mxu0 0.0
    %104 = vmatpush2.msra.mxu0 0.0
    %105 = vmatprep.subr.mxu0 0.0
    %106 = vmatpush2.msra.mxu0 0.0
    %107 = vmatprep.subr.mxu0 0.0
    %108 = vmatpush2.msra.mxu0 0.0
    %109 = vmatprep.subr.mxu0 0.0
    %110 = vmatpush2.msra.mxu0 0.0
    %111 = vmatprep.subr.mxu0 0.0
    %112 = vmatpush2.msra.mxu0 0.0
    %113 = vmatprep.subr.mxu0 0.0
    %114 = vmatpush2.msra.mxu0 0.0
    %115 = vmatprep.subr.mxu0 0.0
    %116 = vmatpush2.msra.mxu0 0.0
    %117 = vmatprep.subr.mxu0 0.0
    %118 = vmatpush2.msra.mxu0 0.0
    %119 = vmatprep.subr.mxu0 0.0
    %120 = vmatpush2.msra.mxu0 0.0
    %121 = vmatprep.subr.mxu0 0.0
    %122 = vmatpush2.msra.mxu0 0.0
    %123 = vmatprep.subr.mxu0 0.0
    %124 = vmatpush2.msra.mxu0 0.0
    %125 = vmatprep.subr.mxu0 0.0
    %126 = vmatpush2.msra.mxu0 0.0
    %127 = vmatprep.mubr.f32.mxu0 0.0
    %128 = vmatmul.mubr.f32.gmra.mxu0 %v58
    %v129 = vpop.f32.mrf.mxu0
    %v130 = vadd.f32 %v54, %v129
    %v131 = vpop.f32.mrf.mxu0
    %132 = vmatprep.mubr.f32.mxu0 0.0
    %133 = vmatmul.mubr.f32.gmra.mxu0 %v61
    %v134 = vpop.f32.mrf.mxu0
    %v135 = vadd.f32 %v54, %v134
    %v136 = vpop.f32.mrf.mxu0
    %137 = vdwg.mxu0
    %vm138 = vcmask 785408
    %139 = vst.msk [vmem:[#allocation7] sm:$0xff] %vm138, %v130
    %140 = vst.msk [vmem:[#allocation7 + $0x8] sm:$0xff] %vm138, %v135
    // Predicated region
    $region22: #{tpu_custom_call.1} parent=1 // pred_check
      _
    $region23: #{tpu_custom_call.1} parent=1 // pred_check_branch
      %142 = sbr.rel (0) target = $region25
    $region24: #{tpu_custom_call.1} parent=1 // pred_region
      %s144 = ssub.s32 256, 256
      %145 = vsyncadd [#allocation4], %s144
      %s146 = sshll.u32 [#allocation7], 4
      %s147 = int_to_ptr.vmem [resolvable:$true] %s146
      %152 = dma.vmem_to_hbm [thread:$0]  %s147, 256, %s3, [#allocation4], 128, 128, 8
    $region25: #{tpu_custom_call.1} parent=1 // pred_fallthru
      _
    // Predicated region
    $region26: #{tpu_custom_call.1} parent=1 // pred_check
      _
    $region27: #{tpu_custom_call.1} parent=1 // pred_check_branch
      %154 = sbr.rel (0) target = $region29
    $region28: #{tpu_custom_call.1} parent=1 // pred_region
      %155 = dma.done [#allocation4], 256
    $region29: #{tpu_custom_call.1} parent=1 // pred_fallthru
      _
    %156 = vsyncpa [#allocation3], 1
    %157 = vsyncpa [#allocation6], 1
    %158 = vsyncpa [#allocation4], 1

</llo_original>
